<compile_context>
chip_gen: v7x
topology: tpu7x:2x2x1
jax: 0.10.0
libtpu: 0.0.40
codegen_flags: <defaults>
</compile_context>

<pallas_src>
import jax
import jax.numpy as jnp
from jax.experimental import pallas as pl
from jax.experimental.pallas import tpu as pltpu


def _round_up(x, m):
    return (x + m - 1) // m * m


# ----------------------------------------------------------------------------- kernel
def gru_seq_kernel(x_ref, h0_ref, wih_ref, whh_ref, bi_ref, bhn_ref, out_ref):
    """Fused GRUCell over time: one grid step == one timestep.

    x_ref   : (Bp, Dp)      current timestep input (padded)
    h0_ref  : (Bp, Hp)      initial hidden (resident, read once at t==0)
    wih_ref : (Dp, 3*Hp)    input->gates weights (per-gate 128-lane-aligned slots)
    whh_ref : (Hp, 3*Hp)    hidden->gates weights
    bi_ref  : (1, 3*Hp)     b_ih with b_hh folded in for the r/z gates
    bhn_ref : (1, Hp)       b_hn (kept separate: it sits inside the r-gated term)
    out_ref : (Bp, Hp) f32  resident output tile; doubles as the hidden-state carry
    """
    t = pl.program_id(0)

    @pl.when(t == 0)
    def _():
        out_ref[...] = h0_ref[...]

    Hp = out_ref.shape[1]
    h = out_ref[...]                                  # carried hidden, f32
    mm_dtype = wih_ref.dtype                          # bf16 (or f32) for the MXU

    # All-gate projections, f32 accumulation on the MXU: (Bp, 3*Hp)
    gi = jnp.dot(x_ref[...].astype(mm_dtype), wih_ref[...],
                 preferred_element_type=jnp.float32) + bi_ref[...]
    gh = jnp.dot(h.astype(mm_dtype), whh_ref[...],
                 preferred_element_type=jnp.float32)

    # Gate slices start at lane offsets 0 / Hp / 2*Hp (multiples of 128) -> vreg aligned.
    r = jax.nn.sigmoid(gi[:, 0:Hp] + gh[:, 0:Hp])
    z = jax.nn.sigmoid(gi[:, Hp:2 * Hp] + gh[:, Hp:2 * Hp])
    n = jnp.tanh(gi[:, 2 * Hp:3 * Hp] + r * (gh[:, 2 * Hp:3 * Hp] + bhn_ref[...]))

    out_ref[...] = (1.0 - z) * n + z * h              # padded lanes/rows stay exactly 0


# --------------------------------------------------------------------------- wrappers
def prepare_params(w_ih, w_hh, b_ih, b_hh, *, matmul_dtype=jnp.bfloat16):
    """One-time parameter repack (hoisted out of the per-call path).

    PyTorch GRUCell layout: w_ih (3H, D), w_hh (3H, H), biases (3H,), gates (r, z, n).
    Each gate is transposed into its own 128-lane-aligned slot of a (K_pad, 3*Hp)
    matrix; r/z biases of b_ih and b_hh are folded together.
    """
    three_h, D = w_ih.shape
    H = three_h // 3
    Hp = _round_up(H, 128)
    Dp = _round_up(D, 128)

    def pack_weight(w, k, kp):                        # (3H, k) -> (kp, 3*Hp)
        out = jnp.zeros((kp, 3 * Hp), jnp.float32)
        for g in range(3):
            out = out.at[:k, g * Hp:g * Hp + H].set(w[g * H:(g + 1) * H, :].T)
        return out.astype(matmul_dtype)

    def pack_bias(b):                                 # (3H,) -> (1, 3*Hp)
        out = jnp.zeros((1, 3 * Hp), jnp.float32)
        for g in range(3):
            out = out.at[0, g * Hp:g * Hp + H].set(b[g * H:(g + 1) * H])
        return out

    bi = pack_bias(b_ih)
    bh = pack_bias(b_hh)
    bi_fold = bi.at[0, 0:2 * Hp].add(bh[0, 0:2 * Hp])   # fold r/z hidden biases
    bhn = bh[:, 2 * Hp:3 * Hp]                          # (1, Hp)

    return dict(wih=pack_weight(w_ih, D, Dp), whh=pack_weight(w_hh, H, Hp),
                bi=bi_fold, bhn=bhn, H=H, D=D, Hp=Hp, Dp=Dp)


def gru_sequence(src_seq, hidden, params):
    """Run the GRUCell over a (T, B, D) sequence in ONE pallas_call; returns final (B, H)."""
    T, B, D = src_seq.shape
    H, Hp, Dp = params["H"], params["Hp"], params["Dp"]
    Bp = _round_up(B, 8)

    x_p = jnp.zeros((T, Bp, Dp), jnp.float32).at[:, :B, :D].set(src_seq.astype(jnp.float32))
    h0_p = jnp.zeros((Bp, Hp), jnp.float32).at[:B, :H].set(hidden.astype(jnp.float32))

    out = pl.pallas_call(
        gru_seq_kernel,
        out_shape=jax.ShapeDtypeStruct((Bp, Hp), jnp.float32),
        grid=(T,),
        in_specs=[
            pl.BlockSpec((None, Bp, Dp), lambda t: (t, 0, 0)),        # per-step src block
            pl.BlockSpec((Bp, Hp), lambda t: (0, 0)),                 # h0 (resident)
            pl.BlockSpec(params["wih"].shape, lambda t: (0, 0)),      # weights resident
            pl.BlockSpec(params["whh"].shape, lambda t: (0, 0)),
            pl.BlockSpec(params["bi"].shape, lambda t: (0, 0)),
            pl.BlockSpec(params["bhn"].shape, lambda t: (0, 0)),
        ],
        out_specs=pl.BlockSpec((Bp, Hp), lambda t: (0, 0)),           # hidden carry / output
        input_output_aliases={1: 0},                                  # hidden -> output buffer
        compiler_params=pltpu.CompilerParams(dimension_semantics=("arbitrary",)),
    )(x_p, h0_p, params["wih"], params["whh"], params["bi"], params["bhn"])

    return out[:B, :H].astype(hidden.dtype)


def encoder_forward(src, hidden, params):
    """Equivalent of Encoder.forward(src, hidden): a single GRUCell step."""
    return gru_sequence(src[None, :, :], hidden, params)


# -------------------------------------------------------------------------- reference
def reference_gru_cell(src, hidden, w_ih, w_hh, b_ih, b_hh):
    """Pure-JAX reference matching torch.nn.GRUCell semantics."""
    H = hidden.shape[1]
    gi = src @ w_ih.T + b_ih
    gh = hidden @ w_hh.T + b_hh
    i_r, i_z, i_n = gi[:, :H], gi[:, H:2 * H], gi[:, 2 * H:]
    h_r, h_z, h_n = gh[:, :H], gh[:, H:2 * H], gh[:, 2 * H:]
    r = jax.nn.sigmoid(i_r + h_r)
    z = jax.nn.sigmoid(i_z + h_z)
    n = jnp.tanh(i_n + r * h_n)
    return (1.0 - z) * n + z * hidden


if __name__ == "__main__":
    batch, input_dim, hid_dim, seq_len = 8, 16, 32, 12

    key = jax.random.PRNGKey(0)
    ks = jax.random.split(key, 6)
    src_seq = jax.random.normal(ks[0], (seq_len, batch, input_dim), jnp.float32)
    hidden0 = jax.random.normal(ks[1], (batch, hid_dim), jnp.float32)

    # Same init distribution as torch.nn.GRUCell: U(-1/sqrt(H), 1/sqrt(H))
    bound = 1.0 / (hid_dim ** 0.5)
    w_ih = jax.random.uniform(ks[2], (3 * hid_dim, input_dim), jnp.float32, -bound, bound)
    w_hh = jax.random.uniform(ks[3], (3 * hid_dim, hid_dim), jnp.float32, -bound, bound)
    b_ih = jax.random.uniform(ks[4], (3 * hid_dim,), jnp.float32, -bound, bound)
    b_hh = jax.random.uniform(ks[5], (3 * hid_dim,), jnp.float32, -bound, bound)

    # --- exactness check: f32 weights, single step (== Encoder.forward) -----------
    params_f32 = prepare_params(w_ih, w_hh, b_ih, b_hh, matmul_dtype=jnp.float32)
    out_step = jax.block_until_ready(encoder_forward(src_seq[0], hidden0, params_f32))
    ref_step = reference_gru_cell(src_seq[0], hidden0, w_ih, w_hh, b_ih, b_hh)
    assert out_step.shape == (batch, hid_dim)
    assert jnp.allclose(out_step, ref_step, atol=1e-5, rtol=1e-5), "single-step mismatch"

    # --- fused sequence, bf16 MXU weights (f32 gate math / accumulation) ----------
    params_bf16 = prepare_params(w_ih, w_hh, b_ih, b_hh, matmul_dtype=jnp.bfloat16)
    out_seq = jax.block_until_ready(gru_sequence(src_seq, hidden0, params_bf16))
    ref_h = hidden0
    for t in range(seq_len):
        ref_h = reference_gru_cell(src_seq[t], ref_h, w_ih, w_hh, b_ih, b_hh)
    assert out_seq.shape == (batch, hid_dim)
    assert jnp.allclose(out_seq, ref_h, atol=2e-2, rtol=2e-2), "sequence mismatch (bf16)"

    print("KERNEL_OK")
</pallas_src>

<mosaic_0001>
module attributes {stable_mosaic.version = 11 : i64} {
  func.func @gru_seq_kernel(%arg0: i32, %arg1: memref<1x8x128xf32, #tpu.memory_space<vmem>>, %arg2: memref<8x128xf32, #tpu.memory_space<vmem>>, %arg3: memref<128x384xf32, #tpu.memory_space<vmem>>, %arg4: memref<128x384xf32, #tpu.memory_space<vmem>>, %arg5: memref<1x384xf32, #tpu.memory_space<vmem>>, %arg6: memref<1x128xf32, #tpu.memory_space<vmem>>, %arg7: memref<8x128xf32, #tpu.memory_space<vmem>>) attributes {dimension_semantics = [#tpu.dimension_semantics<arbitrary>], iteration_bounds = array<i64: 1>, scalar_prefetch = 0 : i64, scratch_operands = 0 : i64, tpu.core_type = #tpu.core_type<tc>, window_params = [{transform_indices = @transform_0, window_bounds = array<i64: 1, 8, 128>}, {pipeline_mode = #tpu.pipeline_mode<synchronous>, transform_indices = @transform_1, window_bounds = array<i64: 8, 128>}, {pipeline_mode = #tpu.pipeline_mode<synchronous>, transform_indices = @transform_2, window_bounds = array<i64: 128, 384>}, {pipeline_mode = #tpu.pipeline_mode<synchronous>, transform_indices = @transform_3, window_bounds = array<i64: 128, 384>}, {pipeline_mode = #tpu.pipeline_mode<synchronous>, transform_indices = @transform_4, window_bounds = array<i64: 1, 384>}, {pipeline_mode = #tpu.pipeline_mode<synchronous>, transform_indices = @transform_5, window_bounds = array<i64: 1, 128>}, {pipeline_mode = #tpu.pipeline_mode<synchronous>, transform_indices = @transform_6, window_bounds = array<i64: 8, 128>}]} {
    %c0_i32 = arith.constant 0 : i32
    %0 = arith.cmpi eq, %arg0, %c0_i32 : i32
    %1 = arith.extui %0 : i1 to i32
    %c0_i32_0 = arith.constant 0 : i32
    %2 = arith.cmpi ne, %1, %c0_i32_0 : i32
    scf.if %2 {
      %c0_19 = arith.constant 0 : index
      %c0_20 = arith.constant 0 : index
      %43 = vector.load %arg2[%c0_19, %c0_20] : memref<8x128xf32, #tpu.memory_space<vmem>>, vector<8x128xf32>
      %c0_21 = arith.constant 0 : index
      %c0_22 = arith.constant 0 : index
      %44 = vector.load %arg7[%c0_21, %c0_22] : memref<8x128xf32, #tpu.memory_space<vmem>>, vector<8x128xf32>
      tpu.vector_store %arg7[%c0_21, %c0_22], %43 {strides = array<i32>} : memref<8x128xf32, #tpu.memory_space<vmem>>, vector<8x128xf32>,
    } else {
    }
    %c0 = arith.constant 0 : index
    %c0_1 = arith.constant 0 : index
    %3 = vector.load %arg7[%c0, %c0_1] : memref<8x128xf32, #tpu.memory_space<vmem>>, vector<8x128xf32>
    %c0_2 = arith.constant 0 : index
    %c0_3 = arith.constant 0 : index
    %c0_4 = arith.constant 0 : index
    %4 = vector.load %arg1[%c0_2, %c0_3, %c0_4] : memref<1x8x128xf32, #tpu.memory_space<vmem>>, vector<1x8x128xf32>
    %5 = vector.shape_cast %4 : vector<1x8x128xf32> to vector<8x128xf32>
    %c0_5 = arith.constant 0 : index
    %c0_6 = arith.constant 0 : index
    %6 = vector.load %arg3[%c0_5, %c0_6] : memref<128x384xf32, #tpu.memory_space<vmem>>, vector<128x384xf32>
    %cst = arith.constant dense<0.000000e+00> : vector<8x384xf32>
    %7 = tpu.matmul %5, %6, %cst {dimension_numbers = #tpu.dot_dimension_numbers<[1], [0], [0], [1], [0, 0, 1, 1], [], []>} : vector<8x128xf32>, vector<128x384xf32>, vector<8x384xf32> -> vector<8x384xf32>
    %c0_7 = arith.constant 0 : index
    %c0_8 = arith.constant 0 : index
    %8 = vector.load %arg5[%c0_7, %c0_8] : memref<1x384xf32, #tpu.memory_space<vmem>>, vector<1x384xf32>
    %9 = vector.broadcast %8 : vector<1x384xf32> to vector<8x384xf32>
    %10 = arith.addf %7, %9 : vector<8x384xf32>
    %c0_9 = arith.constant 0 : index
    %c0_10 = arith.constant 0 : index
    %11 = vector.load %arg4[%c0_9, %c0_10] : memref<128x384xf32, #tpu.memory_space<vmem>>, vector<128x384xf32>
    %cst_11 = arith.constant dense<0.000000e+00> : vector<8x384xf32>
    %12 = tpu.matmul %3, %11, %cst_11 {dimension_numbers = #tpu.dot_dimension_numbers<[1], [0], [0], [1], [0, 0, 1, 1], [], []>} : vector<8x128xf32>, vector<128x384xf32>, vector<8x384xf32> -> vector<8x384xf32>
    %13 = vector.extract_strided_slice %10 {offsets = [0, 0], sizes = [8, 128], strides = [1, 1]} : vector<8x384xf32> to vector<8x128xf32>
    %14 = vector.extract_strided_slice %12 {offsets = [0, 0], sizes = [8, 128], strides = [1, 1]} : vector<8x384xf32> to vector<8x128xf32>
    %15 = arith.addf %13, %14 : vector<8x128xf32>
    %16 = arith.negf %15 : vector<8x128xf32>
    %17 = math.exp %16 : vector<8x128xf32>
    %cst_12 = arith.constant 1.000000e+00 : f32
    %18 = vector.broadcast %cst_12 : f32 to vector<8x128xf32>
    %19 = arith.addf %18, %17 : vector<8x128xf32>
    %20 = arith.divf %18, %19 : vector<8x128xf32>
    %21 = vector.extract_strided_slice %10 {offsets = [0, 128], sizes = [8, 128], strides = [1, 1]} : vector<8x384xf32> to vector<8x128xf32>
    %22 = vector.extract_strided_slice %12 {offsets = [0, 128], sizes = [8, 128], strides = [1, 1]} : vector<8x384xf32> to vector<8x128xf32>
    %23 = arith.addf %21, %22 : vector<8x128xf32>
    %24 = arith.negf %23 : vector<8x128xf32>
    %25 = math.exp %24 : vector<8x128xf32>
    %cst_13 = arith.constant 1.000000e+00 : f32
    %26 = vector.broadcast %cst_13 : f32 to vector<8x128xf32>
    %27 = arith.addf %26, %25 : vector<8x128xf32>
    %28 = arith.divf %26, %27 : vector<8x128xf32>
    %29 = vector.extract_strided_slice %10 {offsets = [0, 256], sizes = [8, 128], strides = [1, 1]} : vector<8x384xf32> to vector<8x128xf32>
    %30 = vector.extract_strided_slice %12 {offsets = [0, 256], sizes = [8, 128], strides = [1, 1]} : vector<8x384xf32> to vector<8x128xf32>
    %c0_14 = arith.constant 0 : index
    %c0_15 = arith.constant 0 : index
    %31 = vector.load %arg6[%c0_14, %c0_15] : memref<1x128xf32, #tpu.memory_space<vmem>>, vector<1x128xf32>
    %32 = vector.broadcast %31 : vector<1x128xf32> to vector<8x128xf32>
    %33 = arith.addf %30, %32 : vector<8x128xf32>
    %34 = arith.mulf %20, %33 : vector<8x128xf32>
    %35 = arith.addf %29, %34 : vector<8x128xf32>
    %36 = math.tanh %35 : vector<8x128xf32>
    %cst_16 = arith.constant 1.000000e+00 : f32
    %37 = vector.broadcast %cst_16 : f32 to vector<8x128xf32>
    %38 = arith.subf %37, %28 : vector<8x128xf32>
    %39 = arith.mulf %38, %36 : vector<8x128xf32>
    %40 = arith.mulf %28, %3 : vector<8x128xf32>
    %41 = arith.addf %39, %40 : vector<8x128xf32>
    %c0_17 = arith.constant 0 : index
    %c0_18 = arith.constant 0 : index
    %42 = vector.load %arg7[%c0_17, %c0_18] : memref<8x128xf32, #tpu.memory_space<vmem>>, vector<8x128xf32>
    tpu.vector_store %arg7[%c0_17, %c0_18], %41 {strides = array<i32>} : memref<8x128xf32, #tpu.memory_space<vmem>>, vector<8x128xf32>,
    return
  }
  func.func @transform_0(%arg0: i32) -> (i32, i32, i32) {
    %c0_i32 = arith.constant 0 : i32
    %c0_i32_0 = arith.constant 0 : i32
    %c0_i32_1 = arith.constant 0 : i32
    return %arg0, %c0_i32, %c0_i32_0 : i32, i32, i32
  }
  func.func @transform_1(%arg0: i32) -> (i32, i32) {
    %c0_i32 = arith.constant 0 : i32
    %c0_i32_0 = arith.constant 0 : i32
    %c0_i32_1 = arith.constant 0 : i32
    return %c0_i32, %c0_i32_0 : i32, i32
  }
  func.func @transform_2(%arg0: i32) -> (i32, i32) {
    %c0_i32 = arith.constant 0 : i32
    %c0_i32_0 = arith.constant 0 : i32
    %c0_i32_1 = arith.constant 0 : i32
    return %c0_i32, %c0_i32_0 : i32, i32
  }
  func.func @transform_3(%arg0: i32) -> (i32, i32) {
    %c0_i32 = arith.constant 0 : i32
    %c0_i32_0 = arith.constant 0 : i32
    %c0_i32_1 = arith.constant 0 : i32
    return %c0_i32, %c0_i32_0 : i32, i32
  }
  func.func @transform_4(%arg0: i32) -> (i32, i32) {
    %c0_i32 = arith.constant 0 : i32
    %c0_i32_0 = arith.constant 0 : i32
    %c0_i32_1 = arith.constant 0 : i32
    return %c0_i32, %c0_i32_0 : i32, i32
  }
  func.func @transform_5(%arg0: i32) -> (i32, i32) {
    %c0_i32 = arith.constant 0 : i32
    %c0_i32_0 = arith.constant 0 : i32
    %c0_i32_1 = arith.constant 0 : i32
    return %c0_i32, %c0_i32_0 : i32, i32
  }
  func.func @transform_6(%arg0: i32) -> (i32, i32) {
    %c0_i32 = arith.constant 0 : i32
    %c0_i32_0 = arith.constant 0 : i32
    %c0_i32_1 = arith.constant 0 : i32
    return %c0_i32, %c0_i32_0 : i32, i32
  }
}

</mosaic_0001>

<llo_original>
// kernel: tpu_custom_call.1
$region0: #{tpu_custom_call.1}
  #allocation0 [shape = 'u32[]', space=smem, size = 0x4, offset = 0x4, fixed_abs, tag = 'smem constant byte address 0x4 - core index']
  #allocation1 [shape = 'u32[144,128]{1,0:T(1,128)}', space=vmem, size = 0x12000, scoped, tag = 'internal scratch']
  %s0 = inlined_call_operand.vmem [shape: f32[1,8,128], index: 0, kind: input, shape index: {}]
  %s1 = inlined_call_operand.hbm [shape: f32[8,128], index: 1, kind: input, shape index: {}, may-alias: {1,6}]
  %s2 = inlined_call_operand.hbm [shape: f32[128,384], index: 2, kind: input, shape index: {}]
  %s3 = inlined_call_operand.hbm [shape: f32[128,384], index: 3, kind: input, shape index: {}]
  %s4 = inlined_call_operand.vmem [shape: f32[1,384], index: 4, kind: input, shape index: {}]
  %s5 = inlined_call_operand.vmem [shape: f32[1,128], index: 5, kind: input, shape index: {}]
  %s6 = inlined_call_operand.hbm [shape: f32[8,128], index: 6, kind: output, shape index: {}, may-alias: {1,6}]
  %s7 = sld [smem:[#allocation0]]
  $region50: #{tpu_custom_call.1} parent=0
    _
  %s9 = ssub.s32 1, %s7
  %s10 = scalar_select 0, %s9, %s7
  $region1: #{tpu_custom_call.1} parent=0
    #allocation2 [shape = 'u8[4096]{0}', space=vmem, size = 0x1000, scoped, tag = 'input window, operand 1, single buffered']
    #allocation3 [shape = 's32[1]{0}', space=sflag, size = 0x4, scoped, tag = 'scoped memory for tpu_custom_call.1']
    #allocation4 [shape = 's32[1]{0}', space=sflag, size = 0x4, scoped, tag = 'scoped memory for tpu_custom_call.1']
    #allocation5 [shape = 'u8[196608]{0}', space=vmem, size = 0x30000, scoped, tag = 'input window, operand 2, single buffered']
    #allocation6 [shape = 's32[1]{0}', space=sflag, size = 0x4, scoped, tag = 'scoped memory for tpu_custom_call.1']
    #allocation7 [shape = 'u8[196608]{0}', space=vmem, size = 0x30000, scoped, tag = 'input window, operand 3, single buffered']
    #allocation8 [shape = 'u8[4096]{0}', space=vmem, size = 0x1000, scoped, tag = 'output window, operand 0, single buffered']
    %11 = vsyncpa [#allocation3], 0
    %12 = vsyncpa [#allocation6], 0
    %13 = vsyncpa [#allocation4], 0
    // Predicated region
    $region2: #{tpu_custom_call.1} parent=1 // pred_check
      _
    $region3: #{tpu_custom_call.1} parent=1 // pred_check_branch
      %15 = sbr.rel (0) target = $region5
    $region4: #{tpu_custom_call.1} parent=1 // pred_region
      _
    $region5: #{tpu_custom_call.1} parent=1 // pred_fallthru
      _
    // Predicated region
    $region6: #{tpu_custom_call.1} parent=1 // pred_check
      _
    $region7: #{tpu_custom_call.1} parent=1 // pred_check_branch
      %17 = sbr.rel (0) target = $region9
    $region8: #{tpu_custom_call.1} parent=1 // pred_region
      %s19 = ssub.s32 128, 128
      %20 = vsyncadd [#allocation3], %s19
      %s22 = sshll.u32 [#allocation2], 4
      %s23 = int_to_ptr.vmem [resolvable:$true] %s22
      %25 = dma.hbm_to_vmem [thread:$0]  %s1, 128, %s23, [#allocation3]
    $region9: #{tpu_custom_call.1} parent=1 // pred_fallthru
      _
    // Predicated region
    $region10: #{tpu_custom_call.1} parent=1 // pred_check
      _
    $region11: #{tpu_custom_call.1} parent=1 // pred_check_branch
      %27 = sbr.rel (0) target = $region13
    $region12: #{tpu_custom_call.1} parent=1 // pred_region
      %s29 = ssub.s32 6144, 6144
      %30 = vsyncadd [#allocation6], %s29
      %s31 = sshll.u32 [#allocation5], 4
      %s32 = int_to_ptr.vmem [resolvable:$true] %s31
      %37 = dma.hbm_to_vmem [thread:$0]  %s2, 6144, %s32, [#allocation6], 384, 384, 24
    $region13: #{tpu_custom_call.1} parent=1 // pred_fallthru
      _
    // Predicated region
    $region14: #{tpu_custom_call.1} parent=1 // pred_check
      _
    $region15: #{tpu_custom_call.1} parent=1 // pred_check_branch
      %39 = sbr.rel (0) target = $region17
    $region16: #{tpu_custom_call.1} parent=1 // pred_region
      %s41 = ssub.s32 6144, 6144
      %42 = vsyncadd [#allocation6], %s41
      %s43 = sshll.u32 [#allocation7], 4
      %s44 = int_to_ptr.vmem [resolvable:$true] %s43
      %49 = dma.hbm_to_vmem [thread:$0]  %s3, 6144, %s44, [#allocation6], 384, 384, 24
    $region17: #{tpu_custom_call.1} parent=1 // pred_fallthru
      _
    // Predicated region
    $region18: #{tpu_custom_call.1} parent=1 // pred_check
      _
    $region19: #{tpu_custom_call.1} parent=1 // pred_check_branch
      %51 = sbr.rel (0) target = $region21
    $region20: #{tpu_custom_call.1} parent=1 // pred_region
      _
    $region21: #{tpu_custom_call.1} parent=1 // pred_fallthru
      _
    // Predicated region
    $region22: #{tpu_custom_call.1} parent=1 // pred_check
      _
    $region23: #{tpu_custom_call.1} parent=1 // pred_check_branch
      %53 = sbr.rel (0) target = $region25
    $region24: #{tpu_custom_call.1} parent=1 // pred_region
      _
    $region25: #{tpu_custom_call.1} parent=1 // pred_fallthru
      _
    // Predicated region
    $region26: #{tpu_custom_call.1} parent=1 // pred_check
      _
    $region27: #{tpu_custom_call.1} parent=1 // pred_check_branch
      %55 = sbr.rel (0) target = $region29
    $region28: #{tpu_custom_call.1} parent=1 // pred_region
      %56 = dma.done [#allocation3], 128
    $region29: #{tpu_custom_call.1} parent=1 // pred_fallthru
      _
    // Predicated region
    $region30: #{tpu_custom_call.1} parent=1 // pred_check
      _
    $region31: #{tpu_custom_call.1} parent=1 // pred_check_branch
      %58 = sbr.rel (0) target = $region33
    $region32: #{tpu_custom_call.1} parent=1 // pred_region
      %59 = dma.done [#allocation6], 6144
    $region33: #{tpu_custom_call.1} parent=1 // pred_fallthru
      _
    // Predicated region
    $region34: #{tpu_custom_call.1} parent=1 // pred_check
      _
    $region35: #{tpu_custom_call.1} parent=1 // pred_check_branch
      %61 = sbr.rel (0) target = $region37
    $region36: #{tpu_custom_call.1} parent=1 // pred_region
      %62 = dma.done [#allocation6], 6144
    $region37: #{tpu_custom_call.1} parent=1 // pred_fallthru
      _
    %p63 = scmp.eq.s32.totalorder 0, 0
    // Predicated region
    $region38: #{tpu_custom_call.1} parent=1 // pred_check
      %p64 = pneg %p63
    $region39: #{tpu_custom_call.1} parent=1 // pred_check_branch
      %66 = sbr.rel (%p64) target = $region41
    $region40: #{tpu_custom_call.1} parent=1 // pred_region
      %v67 = vld [vmem:[#allocation2] sm:$0xff]
      %68 = vst [vmem:[#allocation8] sm:$0xff] %v67
    $region41: #{tpu_custom_call.1} parent=1 // pred_fallthru
      _
    %v69 = vld [vmem:[#allocation8] sm:$0xff]
    %v70 = vld [vmem:[%s0] sm:$0xff]
    %v71 = vld [vmem:[#allocation5] sm:$0xff]
    %v72 = vld [vmem:[#allocation5 + $0x8] sm:$0xff]
    %v73 = vld [vmem:[#allocation5 + $0x10] sm:$0xff]
    %v74 = vld [vmem:[#allocation5 + $0x18] sm:$0xff]
    %v75 = vld [vmem:[#allocation5 + $0x20] sm:$0xff]
    %v76 = vld [vmem:[#allocation5 + $0x28] sm:$0xff]
    %v77 = vld [vmem:[#allocation5 + $0x30] sm:$0xff]
    %v78 = vld [vmem:[#allocation5 + $0x38] sm:$0xff]
    %v79 = vld [vmem:[#allocation5 + $0x40] sm:$0xff]
    %v80 = vld [vmem:[#allocation5 + $0x48] sm:$0xff]
    %v81 = vld [vmem:[#allocation5 + $0x50] sm:$0xff]
    %v82 = vld [vmem:[#allocation5 + $0x58] sm:$0xff]
    %v83 = vld [vmem:[#allocation5 + $0x60] sm:$0xff]
    %v84 = vld [vmem:[#allocation5 + $0x68] sm:$0xff]
    %v85 = vld [vmem:[#allocation5 + $0x70] sm:$0xff]
    %v86 = vld [vmem:[#allocation5 + $0x78] sm:$0xff]
    %v87 = vld [vmem:[#allocation5 + $0x80] sm:$0xff]
    %v88 = vld [vmem:[#allocation5 + $0x88] sm:$0xff]
    %v89 = vld [vmem:[#allocation5 + $0x90] sm:$0xff]
    %v90 = vld [vmem:[#allocation5 + $0x98] sm:$0xff]
    %v91 = vld [vmem:[#allocation5 + $0xa0] sm:$0xff]
    %v92 = vld [vmem:[#allocation5 + $0xa8] sm:$0xff]
    %v93 = vld [vmem:[#allocation5 + $0xb0] sm:$0xff]
    %v94 = vld [vmem:[#allocation5 + $0xb8] sm:$0xff]
    %v95 = vld [vmem:[#allocation5 + $0xc0] sm:$0xff]
    %v96 = vld [vmem:[#allocation5 + $0xc8] sm:$0xff]
    %v97 = vld [vmem:[#allocation5 + $0xd0] sm:$0xff]
    %v98 = vld [vmem:[#allocation5 + $0xd8] sm:$0xff]
    %v99 = vld [vmem:[#allocation5 + $0xe0] sm:$0xff]
    %v100 = vld [vmem:[#allocation5 + $0xe8] sm:$0xff]
    %v101 = vld [vmem:[#allocation5 + $0xf0] sm:$0xff]
    %v102 = vld [vmem:[#allocation5 + $0xf8] sm:$0xff]
    %v103 = vld [vmem:[#allocation5 + $0x100] sm:$0xff]
    %v104 = vld [vmem:[#allocation5 + $0x108] sm:$0xff]
    %v105 = vld [vmem:[#allocation5 + $0x110] sm:$0xff]
    %v106 = vld [vmem:[#allocation5 + $0x118] sm:$0xff]
    %v107 = vld [vmem:[#allocation5 + $0x120] sm:$0xff]
    %v108 = vld [vmem:[#allocation5 + $0x128] sm:$0xff]
    %v109 = vld [vmem:[#allocation5 + $0x130] sm:$0xff]
    %v110 = vld [vmem:[#allocation5 + $0x138] sm:$0xff]
    %v111 = vld [vmem:[#allocation5 + $0x140] sm:$0xff]
    %v112 = vld [vmem:[#allocation5 + $0x148] sm:$0xff]
    %v113 = vld [vmem:[#allocation5 + $0x150] sm:$0xff]
    %v114 = vld [vmem:[#allocation5 + $0x158] sm:$0xff]
    %v115 = vld [vmem:[#allocation5 + $0x160] sm:$0xff]
    %v116 = vld [vmem:[#allocation5 + $0x168] sm:$0xff]
    %v117 = vld [vmem:[#allocation5 + $0x170] sm:$0xff]
    %v118 = vld [vmem:[#allocation5 + $0x178] sm:$0xff]
    %v119 = vld [vmem:[%s4] sm:$0x7]
    %v121 = vlaneseq
    %v122 = vshrl.u32 %v121, 7
    %v123 = vsub.s32 0, %v122
    %v124 = vrot.slane %v119, %v123
    %v125 = vlaneseq
    %v126 = vshrl.u32 %v125, 7
    %v127 = vsub.s32 1, %v126
    %v128 = vrot.slane %v119, %v127
    %v129 = vlaneseq
    %v130 = vshrl.u32 %v129, 7
    %v131 = vsub.s32 2, %v130
    %v132 = vrot.slane %v119, %v131
    %136 = vmatprep.subr.mxu0 %v72
    %137 = vmatpush1.msra.mxu0 %v71
    %138 = vmatprep.subr.mxu0 %v75
    %139 = vmatpush1.msra.mxu0 %v74
    %140 = vmatprep.subr.mxu0 %v78
    %141 = vmatpush1.msra.mxu0 %v77
    %142 = vmatprep.subr.mxu0 %v81
    %143 = vmatpush1.msra.mxu0 %v80
    %144 = vmatprep.subr.mxu0 %v84
    %145 = vmatpush1.msra.mxu0 %v83
    %146 = vmatprep.subr.mxu0 %v87
    %147 = vmatpush1.msra.mxu0 %v86
    %148 = vmatprep.subr.mxu0 %v90
    %149 = vmatpush1.msra.mxu0 %v89
    %150 = vmatprep.subr.mxu0 %v93
    %151 = vmatpush1.msra.mxu0 %v92
    %152 = vmatprep.subr.mxu0 %v96
    %153 = vmatpush1.msra.mxu0 %v95
    %154 = vmatprep.subr.mxu0 %v99
    %155 = vmatpush1.msra.mxu0 %v98
    %156 = vmatprep.subr.mxu0 %v102
    %157 = vmatpush1.msra.mxu0 %v101
    %158 = vmatprep.subr.mxu0 %v105
    %159 = vmatpush1.msra.mxu0 %v104
    %160 = vmatprep.subr.mxu0 %v108
    %161 = vmatpush1.msra.mxu0 %v107
    %162 = vmatprep.subr.mxu0 %v111
    %163 = vmatpush1.msra.mxu0 %v110
    %164 = vmatprep.subr.mxu0 %v114
    %165 = vmatpush1.msra.mxu0 %v113
    %166 = vmatprep.subr.mxu0 %v117
    %167 = vmatpush1.msra.mxu0 %v116
    %168 = vmatprep.subr.mxu0 0.0
    %169 = vmatpush1.msra.mxu0 0.0
    %170 = vmatprep.subr.mxu0 0.0
    %171 = vmatpush1.msra.mxu0 0.0
    %172 = vmatprep.subr.mxu0 0.0
    %173 = vmatpush1.msra.mxu0 0.0
    %174 = vmatprep.subr.mxu0 0.0
    %175 = vmatpush1.msra.mxu0 0.0
    %176 = vmatprep.subr.mxu0 0.0
    %177 = vmatpush1.msra.mxu0 0.0
    %178 = vmatprep.subr.mxu0 0.0
    %179 = vmatpush1.msra.mxu0 0.0
    %180 = vmatprep.subr.mxu0 0.0
    %181 = vmatpush1.msra.mxu0 0.0
    %182 = vmatprep.subr.mxu0 0.0
    %183 = vmatpush1.msra.mxu0 0.0
    %184 = vmatprep.subr.mxu0 0.0
    %185 = vmatpush1.msra.mxu0 0.0
    %186 = vmatprep.subr.mxu0 0.0
    %187 = vmatpush1.msra.mxu0 0.0
    %188 = vmatprep.subr.mxu0 0.0
    %189 = vmatpush1.msra.mxu0 0.0
    %190 = vmatprep.subr.mxu0 0.0
    %191 = vmatpush1.msra.mxu0 0.0
    %192 = vmatprep.subr.mxu0 0.0
    %193 = vmatpush1.msra.mxu0 0.0
    %194 = vmatprep.subr.mxu0 0.0
    %195 = vmatpush1.msra.mxu0 0.0
    %196 = vmatprep.subr.mxu0 0.0
    %197 = vmatpush1.msra.mxu0 0.0
    %198 = vmatprep.subr.mxu0 0.0
    %199 = vmatpush1.msra.mxu0 0.0
    %200 = vmatprep.mubr.f32.mxu0 0.0
    %201 = vmatmul.mubr.f32.gmra.mrb[0].mxu0 %v70
    %v202 = vpop.f32.mrb[0].mxu0
    %v203 = vadd.f32 %v124, %v202
    %v204 = vpop.f32.mrb[0].mxu0
    %v205 = vadd.f32 %v128, %v204
    %206 = vdwg.mxu0
    %207 = vmatprep.subr.mxu0 0.0
    %208 = vmatpush1.msra.mxu0 %v73
    %209 = vmatprep.subr.mxu0 0.0
    %210 = vmatpush1.msra.mxu0 %v76
    %211 = vmatprep.subr.mxu0 0.0
    %212 = vmatpush1.msra.mxu0 %v79
    %213 = vmatprep.subr.mxu0 0.0
    %214 = vmatpush1.msra.mxu0 %v82
    %215 = vmatprep.subr.mxu0 0.0
    %216 = vmatpush1.msra.mxu0 %v85
    %217 = vmatprep.subr.mxu0 0.0
    %218 = vmatpush1.msra.mxu0 %v88
    %219 = vmatprep.subr.mxu0 0.0
    %220 = vmatpush1.msra.mxu0 %v91
    %221 = vmatprep.subr.mxu0 0.0
    %222 = vmatpush1.msra.mxu0 %v94
    %223 = vmatprep.subr.mxu0 0.0
    %224 = vmatpush1.msra.mxu0 %v97
    %225 = vmatprep.subr.mxu0 0.0
    %226 = vmatpush1.msra.mxu0 %v100
    %227 = vmatprep.subr.mxu0 0.0
    %228 = vmatpush1.msra.mxu0 %v103
    %229 = vmatprep.subr.mxu0 0.0
    %230 = vmatpush1.msra.mxu0 %v106
    %231 = vmatprep.subr.mxu0 0.0
    %232 = vmatpush1.msra.mxu0 %v109
    %233 = vmatprep.subr.mxu0 0.0
    %234 = vmatpush1.msra.mxu0 %v112
    %235 = vmatprep.subr.mxu0 0.0
    %236 = vmatpush1.msra.mxu0 %v115
    %237 = vmatprep.subr.mxu0 0.0
    %238 = vmatpush1.msra.mxu0 %v118
    %239 = vmatprep.subr.mxu0 0.0
    %240 = vmatpush1.msra.mxu0 0.0
    %241 = vmatprep.subr.mxu0 0.0
    %242 = vmatpush1.msra.mxu0 0.0
    %243 = vmatprep.subr.mxu0 0.0
    %244 = vmatpush1.msra.mxu0 0.0
    %245 = vmatprep.subr.mxu0 0.0
    %246 = vmatpush1.msra.mxu0 0.0
    %247 = vmatprep.subr.mxu0 0.0
    %248 = vmatpush1.msra.mxu0 0.0
    %249 = vmatprep.subr.mxu0 0.0
    %250 = vmatpush1.msra.mxu0 0.0
    %251 = vmatprep.subr.mxu0 0.0
    %252 = vmatpush1.msra.mxu0 0.0
    %253 = vmatprep.subr.mxu0 0.0
    %254 = vmatpush1.msra.mxu0 0.0
    %255 = vmatprep.subr.mxu0 0.0
    %256 = vmatpush1.msra.mxu0 0.0
    %257 = vmatprep.subr.mxu0 0.0
    %258 = vmatpush1.msra.mxu0 0.0
    %259 = vmatprep.subr.mxu0 0.0
    %260 = vmatpush1.msra.mxu0 0.0
    %261 = vmatprep.subr.mxu0 0.0
    %262 = vmatpush1.msra.mxu0 0.0
    %263 = vmatprep.subr.mxu0 0.0
    %264 = vmatpush1.msra.mxu0 0.0
    %265 = vmatprep.subr.mxu0 0.0
    %266 = vmatpush1.msra.mxu0 0.0
    %267 = vmatprep.subr.mxu0 0.0
    %268 = vmatpush1.msra.mxu0 0.0
    %269 = vmatprep.subr.mxu0 0.0
    %270 = vmatpush1.msra.mxu0 0.0
    %271 = vmatprep.mubr.f32.mxu0 0.0
    %272 = vmatmul.mubr.f32.gmra.mrb[0].mxu0 %v70
    %v273 = vpop.f32.mrb[0].mxu0
    %v274 = vadd.f32 %v132, %v273
    %v275 = vpop.f32.mrb[0].mxu0
    %276 = vdwg.mxu0
    %v277 = vld [vmem:[#allocation7] sm:$0xff]
    %v278 = vld [vmem:[#allocation7 + $0x8] sm:$0xff]
    %v279 = vld [vmem:[#allocation7 + $0x10] sm:$0xff]
    %v280 = vld [vmem:[#allocation7 + $0x18] sm:$0xff]
    %v281 = vld [vmem:[#allocation7 + $0x20] sm:$0xff]
    %v282 = vld [vmem:[#allocation7 + $0x28] sm:$0xff]
    %v283 = vld [vmem:[#allocation7 + $0x30] sm:$0xff]
    %v284 = vld [vmem:[#allocation7 + $0x38] sm:$0xff]
    %v285 = vld [vmem:[#allocation7 + $0x40] sm:$0xff]
    %v286 = vld [vmem:[#allocation7 + $0x48] sm:$0xff]
    %v287 = vld [vmem:[#allocation7 + $0x50] sm:$0xff]
    %v288 = vld [vmem:[#allocation7 + $0x58] sm:$0xff]
    %v289 = vld [vmem:[#allocation7 + $0x60] sm:$0xff]
    %v290 = vld [vmem:[#allocation7 + $0x68] sm:$0xff]
    %v291 = vld [vmem:[#allocation7 + $0x70] sm:$0xff]
    %v292 = vld [vmem:[#allocation7 + $0x78] sm:$0xff]
    %v293 = vld [vmem:[#allocation7 + $0x80] sm:$0xff]
    %v294 = vld [vmem:[#allocation7 + $0x88] sm:$0xff]
    %v295 = vld [vmem:[#allocation7 + $0x90] sm:$0xff]
    %v296 = vld [vmem:[#allocation7 + $0x98] sm:$0xff]
    %v297 = vld [vmem:[#allocation7 + $0xa0] sm:$0xff]
    %v298 = vld [vmem:[#allocation7 + $0xa8] sm:$0xff]
    %v299 = vld [vmem:[#allocation7 + $0xb0] sm:$0xff]
    %v300 = vld [vmem:[#allocation7 + $0xb8] sm:$0xff]
    %v301 = vld [vmem:[#allocation7 + $0xc0] sm:$0xff]
    %v302 = vld [vmem:[#allocation7 + $0xc8] sm:$0xff]
    %v303 = vld [vmem:[#allocation7 + $0xd0] sm:$0xff]
    %v304 = vld [vmem:[#allocation7 + $0xd8] sm:$0xff]
    %v305 = vld [vmem:[#allocation7 + $0xe0] sm:$0xff]
    %v306 = vld [vmem:[#allocation7 + $0xe8] sm:$0xff]
    %v307 = vld [vmem:[#allocation7 + $0xf0] sm:$0xff]
    %v308 = vld [vmem:[#allocation7 + $0xf8] sm:$0xff]
    %v309 = vld [vmem:[#allocation7 + $0x100] sm:$0xff]
    %v310 = vld [vmem:[#allocation7 + $0x108] sm:$0xff]
    %v311 = vld [vmem:[#allocation7 + $0x110] sm:$0xff]
    %v312 = vld [vmem:[#allocation7 + $0x118] sm:$0xff]
    %v313 = vld [vmem:[#allocation7 + $0x120] sm:$0xff]
    %v314 = vld [vmem:[#allocation7 + $0x128] sm:$0xff]
    %v315 = vld [vmem:[#allocation7 + $0x130] sm:$0xff]
    %v316 = vld [vmem:[#allocation7 + $0x138] sm:$0xff]
    %v317 = vld [vmem:[#allocation7 + $0x140] sm:$0xff]
    %v318 = vld [vmem:[#allocation7 + $0x148] sm:$0xff]
    %v319 = vld [vmem:[#allocation7 + $0x150] sm:$0xff]
    %v320 = vld [vmem:[#allocation7 + $0x158] sm:$0xff]
    %v321 = vld [vmem:[#allocation7 + $0x160] sm:$0xff]
    %v322 = vld [vmem:[#allocation7 + $0x168] sm:$0xff]
    %v323 = vld [vmem:[#allocation7 + $0x170] sm:$0xff]
    %v324 = vld [vmem:[#allocation7 + $0x178] sm:$0xff]
    %325 = vmatprep.subr.mxu0 %v278
    %326 = vmatpush1.msra.mxu0 %v277
    %327 = vmatprep.subr.mxu0 %v281
    %328 = vmatpush1.msra.mxu0 %v280
    %329 = vmatprep.subr.mxu0 %v284
    %330 = vmatpush1.msra.mxu0 %v283
    %331 = vmatprep.subr.mxu0 %v287
    %332 = vmatpush1.msra.mxu0 %v286
    %333 = vmatprep.subr.mxu0 %v290
    %334 = vmatpush1.msra.mxu0 %v289
    %335 = vmatprep.subr.mxu0 %v293
    %336 = vmatpush1.msra.mxu0 %v292
    %337 = vmatprep.subr.mxu0 %v296
    %338 = vmatpush1.msra.mxu0 %v295
    %339 = vmatprep.subr.mxu0 %v299
    %340 = vmatpush1.msra.mxu0 %v298
    %341 = vmatprep.subr.mxu0 %v302
    %342 = vmatpush1.msra.mxu0 %v301
    %343 = vmatprep.subr.mxu0 %v305
    %344 = vmatpush1.msra.mxu0 %v304
    %345 = vmatprep.subr.mxu0 %v308
    %346 = vmatpush1.msra.mxu0 %v307
    %347 = vmatprep.subr.mxu0 %v311
    %348 = vmatpush1.msra.mxu0 %v310
    %349 = vmatprep.subr.mxu0 %v314
    %350 = vmatpush1.msra.mxu0 %v313
    %351 = vmatprep.subr.mxu0 %v317
    %352 = vmatpush1.msra.mxu0 %v316
    %353 = vmatprep.subr.mxu0 %v320
    %354 = vmatpush1.msra.mxu0 %v319
    %355 = vmatprep.subr.mxu0 %v323
    %356 = vmatpush1.msra.mxu0 %v322
    %357 = vmatprep.subr.mxu0 0.0
    %358 = vmatpush1.msra.mxu0 0.0
    %359 = vmatprep.subr.mxu0 0.0
    %360 = vmatpush1.msra.mxu0 0.0
    %361 = vmatprep.subr.mxu0 0.0
    %362 = vmatpush1.msra.mxu0 0.0
    %363 = vmatprep.subr.mxu0 0.0
    %364 = vmatpush1.msra.mxu0 0.0
    %365 = vmatprep.subr.mxu0 0.0
    %366 = vmatpush1.msra.mxu0 0.0
    %367 = vmatprep.subr.mxu0 0.0
    %368 = vmatpush1.msra.mxu0 0.0
    %369 = vmatprep.subr.mxu0 0.0
    %370 = vmatpush1.msra.mxu0 0.0
    %371 = vmatprep.subr.mxu0 0.0
    %372 = vmatpush1.msra.mxu0 0.0
    %373 = vmatprep.subr.mxu0 0.0
    %374 = vmatpush1.msra.mxu0 0.0
    %375 = vmatprep.subr.mxu0 0.0
    %376 = vmatpush1.msra.mxu0 0.0
    %377 = vmatprep.subr.mxu0 0.0
    %378 = vmatpush1.msra.mxu0 0.0
    %379 = vmatprep.subr.mxu0 0.0
    %380 = vmatpush1.msra.mxu0 0.0
    %381 = vmatprep.subr.mxu0 0.0
    %382 = vmatpush1.msra.mxu0 0.0
    %383 = vmatprep.subr.mxu0 0.0
    %384 = vmatpush1.msra.mxu0 0.0
    %385 = vmatprep.subr.mxu0 0.0
    %386 = vmatpush1.msra.mxu0 0.0
    %387 = vmatprep.subr.mxu0 0.0
    %388 = vmatpush1.msra.mxu0 0.0
    %389 = vmatprep.mubr.f32.mxu0 0.0
    %390 = vmatmul.mubr.f32.gmra.mrb[0].mxu0 %v69
    %v391 = vpop.f32.mrb[0].mxu0
    %v392 = vadd.f32 0.0, %v391
    %v393 = vpop.f32.mrb[0].mxu0
    %v394 = vadd.f32 0.0, %v393
    %395 = vdwg.mxu0
    %396 = vmatprep.subr.mxu0 0.0
    %397 = vmatpush1.msra.mxu0 %v279
    %398 = vmatprep.subr.mxu0 0.0
    %399 = vmatpush1.msra.mxu0 %v282
    %400 = vmatprep.subr.mxu0 0.0
    %401 = vmatpush1.msra.mxu0 %v285
    %402 = vmatprep.subr.mxu0 0.0
    %403 = vmatpush1.msra.mxu0 %v288
    %404 = vmatprep.subr.mxu0 0.0
    %405 = vmatpush1.msra.mxu0 %v291
    %406 = vmatprep.subr.mxu0 0.0
    %407 = vmatpush1.msra.mxu0 %v294
    %408 = vmatprep.subr.mxu0 0.0
    %409 = vmatpush1.msra.mxu0 %v297
    %410 = vmatprep.subr.mxu0 0.0
    %411 = vmatpush1.msra.mxu0 %v300
    %412 = vmatprep.subr.mxu0 0.0
    %413 = vmatpush1.msra.mxu0 %v303
    %414 = vmatprep.subr.mxu0 0.0
    %415 = vmatpush1.msra.mxu0 %v306
    %416 = vmatprep.subr.mxu0 0.0
    %417 = vmatpush1.msra.mxu0 %v309
    %418 = vmatprep.subr.mxu0 0.0
    %419 = vmatpush1.msra.mxu0 %v312
    %420 = vmatprep.subr.mxu0 0.0
    %421 = vmatpush1.msra.mxu0 %v315
    %422 = vmatprep.subr.mxu0 0.0
    %423 = vmatpush1.msra.mxu0 %v318
    %424 = vmatprep.subr.mxu0 0.0
    %425 = vmatpush1.msra.mxu0 %v321
    %426 = vmatprep.subr.mxu0 0.0
    %427 = vmatpush1.msra.mxu0 %v324
    %428 = vmatprep.subr.mxu0 0.0
    %429 = vmatpush1.msra.mxu0 0.0
    %430 = vmatprep.subr.mxu0 0.0
    %431 = vmatpush1.msra.mxu0 0.0
    %432 = vmatprep.subr.mxu0 0.0
    %433 = vmatpush1.msra.mxu0 0.0
    %434 = vmatprep.subr.mxu0 0.0
    %435 = vmatpush1.msra.mxu0 0.0
    %436 = vmatprep.subr.mxu0 0.0
    %437 = vmatpush1.msra.mxu0 0.0
    %438 = vmatprep.subr.mxu0 0.0
    %439 = vmatpush1.msra.mxu0 0.0
    %440 = vmatprep.subr.mxu0 0.0
    %441 = vmatpush1.msra.mxu0 0.0
    %442 = vmatprep.subr.mxu0 0.0
    %443 = vmatpush1.msra.mxu0 0.0
    %444 = vmatprep.subr.mxu0 0.0
    %445 = vmatpush1.msra.mxu0 0.0
    %446 = vmatprep.subr.mxu0 0.0
    %447 = vmatpush1.msra.mxu0 0.0
    %448 = vmatprep.subr.mxu0 0.0
    %449 = vmatpush1.msra.mxu0 0.0
    %450 = vmatprep.subr.mxu0 0.0
    %451 = vmatpush1.msra.mxu0 0.0
    %452 = vmatprep.subr.mxu0 0.0
    %453 = vmatpush1.msra.mxu0 0.0
    %454 = vmatprep.subr.mxu0 0.0
    %455 = vmatpush1.msra.mxu0 0.0
    %456 = vmatprep.subr.mxu0 0.0
    %457 = vmatpush1.msra.mxu0 0.0
    %458 = vmatprep.subr.mxu0 0.0
    %459 = vmatpush1.msra.mxu0 0.0
    %460 = vmatprep.mubr.f32.mxu0 0.0
    %461 = vmatmul.mubr.f32.gmra.mrb[0].mxu0 %v69
    %v462 = vpop.f32.mrb[0].mxu0
    %v463 = vadd.f32 0.0, %v462
    %v464 = vpop.f32.mrb[0].mxu0
    %465 = vdwg.mxu0
    %v466 = vadd.f32 %v203, %v392
    %v467 = vxor.u32 %v466, 2147483648
    %v468 = vmul.f32 %v467, 1.442695
    %v469 = vpow.pop %v468
    %v470 = vadd.f32 %v469, 1.0
    %v471 = vrcp.pop %v470
    %v472 = vmul.f32 1.0, %v471
    %v473 = vadd.f32 %v205, %v394
    %v474 = vxor.u32 %v473, 2147483648
    %v475 = vmul.f32 %v474, 1.442695
    %v476 = vpow.pop %v475
    %v477 = vadd.f32 %v476, 1.0
    %v478 = vrcp.pop %v477
    %v479 = vmul.f32 1.0, %v478
    %v480 = vld [vmem:[%s5] sm:$0x1]
    %v482 = vlaneseq
    %v483 = vshrl.u32 %v482, 7
    %v484 = vsub.s32 0, %v483
    %v485 = vrot.slane %v480, %v484
    %v487 = vadd.f32 %v463, %v485
    %v488 = vmul.f32 %v472, %v487
    %v489 = vadd.f32 %v274, %v488
    %v490 = vtanh.pop %v489
    %v491 = vsub.f32 1.0, %v479
    %v492 = vmul.f32 %v491, %v490
    %v493 = vmul.f32 %v479, %v69
    %v494 = vadd.f32 %v492, %v493
    %495 = vst [vmem:[#allocation8] sm:$0xff] %v494
    // Predicated region
    $region42: #{tpu_custom_call.1} parent=1 // pred_check
      _
    $region43: #{tpu_custom_call.1} parent=1 // pred_check_branch
      %497 = sbr.rel (0) target = $region45
    $region44: #{tpu_custom_call.1} parent=1 // pred_region
      %s499 = ssub.s32 128, 128
      %500 = vsyncadd [#allocation4], %s499
      %s502 = sshll.u32 [#allocation8], 4
      %s503 = int_to_ptr.vmem [resolvable:$true] %s502
      %505 = dma.vmem_to_hbm [thread:$0]  %s503, 128, %s6, [#allocation4]
    $region45: #{tpu_custom_call.1} parent=1 // pred_fallthru
      _
    // Predicated region
    $region46: #{tpu_custom_call.1} parent=1 // pred_check
      _
    $region47: #{tpu_custom_call.1} parent=1 // pred_check_branch
      %507 = sbr.rel (0) target = $region49
    $region48: #{tpu_custom_call.1} parent=1 // pred_region
      %508 = dma.done [#allocation4], 128
    $region49: #{tpu_custom_call.1} parent=1 // pred_fallthru
      _
    %509 = vsyncpa [#allocation3], 1
    %510 = vsyncpa [#allocation6], 1
    %511 = vsyncpa [#allocation4], 1

</llo_original>
